<compile_context>
chip_gen: v7x
topology: tpu7x:2x2x1
jax: 0.10.0
libtpu: 0.0.40
codegen_flags: <defaults>
</compile_context>

<pallas_src>
import jax
import jax.numpy as jnp
from jax import lax
from jax.experimental import pallas as pl
from jax.experimental.pallas import tpu as pltpu


def _round_up(x, m):
    return ((x + m - 1) // m) * m


# ----------------------------- kernel ---------------------------------------


def _make_fused_mlp_kernel(n_hidden, unrolled_max=4):
    """Builds the fused-MLP kernel body (n_hidden = number of hidden->hidden layers)."""

    def _layer(act, w, b, relu):
        # MXU matmul with f32 accumulation; bias add / relu in f32.
        y = jnp.dot(act.astype(w.dtype), w, preferred_element_type=jnp.float32)
        y = y + b  # biases are always f32
        return jnp.maximum(y, 0.0) if relu else y

    if n_hidden > 0:

        def kernel(x_ref, wf_ref, bf_ref, wh_ref, bh_ref, wl_ref, bl_ref, o_ref):
            act = _layer(x_ref[...], wf_ref[...], bf_ref[...], relu=True)
            if n_hidden <= unrolled_max:
                for li in range(n_hidden):  # small depth: static unroll
                    act = _layer(act, wh_ref[li], bh_ref[li], relu=True)
            else:  # deep MLP: bound live ranges / code size with a real loop
                act = lax.fori_loop(
                    0, n_hidden,
                    lambda li, a: _layer(a, wh_ref[li], bh_ref[li], relu=True),
                    act)
            o_ref[...] = _layer(act, wl_ref[...], bl_ref[...], relu=False).astype(o_ref.dtype)

    else:

        def kernel(x_ref, wf_ref, bf_ref, wl_ref, bl_ref, o_ref):
            act = _layer(x_ref[...], wf_ref[...], bf_ref[...], relu=True)
            o_ref[...] = _layer(act, wl_ref[...], bl_ref[...], relu=False).astype(o_ref.dtype)

    return kernel


# ----------------------------- pallas_call wrapper ---------------------------


def fused_mlp_pallas(x_in, packed, *, tm, single_buffer_weights=True):
    """x_in: (Mp, Pin) with Mp % tm == 0. Runs the whole MLP in one pallas_call."""
    Mp, Pin = x_in.shape
    Ph, Pout = packed["Ph"], packed["Pout"]
    n_hidden = packed["n_hidden"]
    w_first, b_first = packed["w_first"], packed["b_first"]
    w_last, b_last = packed["w_last"], packed["b_last"]
    w_hidden, b_hidden = packed["w_hidden"], packed["b_hidden"]
    assert Mp % tm == 0 and Pin == packed["Pin"]

    w_itemsize = jnp.dtype(w_first.dtype).itemsize
    act_itemsize = jnp.dtype(x_in.dtype).itemsize
    weight_bytes = (Pin * Ph + n_hidden * Ph * Ph + Ph * Pout) * w_itemsize
    bias_bytes = ((1 + n_hidden) * Ph + Pout) * 4
    flops = 2 * Mp * (Pin * Ph + n_hidden * Ph * Ph + Ph * Pout)
    bytes_accessed = Mp * (Pin + Pout) * act_itemsize + weight_bytes + bias_bytes
    cost = pl.CostEstimate(flops=flops, transcendentals=0,
                           bytes_accessed=int(bytes_accessed))

    kernel = _make_fused_mlp_kernel(n_hidden)
    grid = (Mp // tm,)

    def build_and_call(single_buffer):
        # Grid-invariant weights/biases: constant index_map -> DMA'd once, VMEM
        # resident across the whole grid.  Single-buffer them (they're never
        # re-fetched) to halve their VMEM footprint -- matters on v7x (64 MiB
        # physical VMEM, 32 MiB default scoped limit).
        w_kw = {"pipeline_mode": pl.Buffered(buffer_count=1)} if single_buffer else {}

        in_specs = [
            pl.BlockSpec((tm, Pin), lambda i: (i, 0)),            # streamed activations
            pl.BlockSpec((Pin, Ph), lambda i: (0, 0), **w_kw),    # first-layer weight
            pl.BlockSpec((1, Ph), lambda i: (0, 0), **w_kw),      # first-layer bias
        ]
        args = [x_in, w_first, b_first]
        if n_hidden > 0:
            in_specs += [
                pl.BlockSpec((n_hidden, Ph, Ph), lambda i: (0, 0, 0), **w_kw),
                pl.BlockSpec((n_hidden, 1, Ph), lambda i: (0, 0, 0), **w_kw),
            ]
            args += [w_hidden, b_hidden]
        in_specs += [
            pl.BlockSpec((Ph, Pout), lambda i: (0, 0), **w_kw),   # last-layer weight
            pl.BlockSpec((1, Pout), lambda i: (0, 0), **w_kw),    # last-layer bias
        ]
        args += [w_last, b_last]

        # Explicit VMEM budget: double-buffered streamed in/out tiles + resident
        # weights + per-layer activation headroom; clamped to what every target
        # chip can grant (v5e/v6e 128 MiB, v7x 64 MiB physical).
        wbuf = 1 if single_buffer else 2
        stream_bytes = 2 * tm * Pin * act_itemsize + 2 * tm * Pout * act_itemsize
        scratch_bytes = 2 * tm * max(Ph, Pout) * 4
        needed = wbuf * (weight_bytes + bias_bytes) + stream_bytes + scratch_bytes
        vmem_limit = int(min(max(2 * needed, 32 << 20), 64 << 20))

        return pl.pallas_call(
            kernel,
            out_shape=jax.ShapeDtypeStruct((Mp, Pout), x_in.dtype),
            grid=grid,
            in_specs=in_specs,
            out_specs=pl.BlockSpec((tm, Pout), lambda i: (i, 0)),  # lane-dense stores
            compiler_params=pltpu.CompilerParams(
                dimension_semantics=("parallel",),  # M tiles shard across v7x's 2 TCs
                vmem_limit_bytes=vmem_limit,
            ),
            cost_estimate=cost,
        )(*args)

    if single_buffer_weights:
        try:
            return build_and_call(True)
        except Exception:  # fallback if this Pallas build rejects Buffered(1)
            pass
    return build_and_call(False)


# ----------------------------- host-side helpers -----------------------------


def init_multi_linear_params(key, n_layers, input_size, hidden_size, output_size):
    """nn.Linear-style U(-1/sqrt(fan_in), 1/sqrt(fan_in)) init.

    Weights are stored as (in, out) so the kernel computes y = x @ W + b.
    """
    n_linears = max(n_layers, 2)  # the module always has >= 2 nn.Linear's
    dims = [input_size] + [hidden_size] * (n_linears - 1) + [output_size]
    params = []
    for li in range(n_linears):
        fan_in, fan_out = dims[li], dims[li + 1]
        key, kw, kb = jax.random.split(key, 3)
        bound = 1.0 / (fan_in ** 0.5)
        w = jax.random.uniform(kw, (fan_in, fan_out), jnp.float32, -bound, bound)
        b = jax.random.uniform(kb, (1, fan_out), jnp.float32, -bound, bound)
        params.append((w, b))
    return params


def pack_multi_linear_params(params, input_size, *, weight_dtype=jnp.float32):
    """Pad in/hidden/out dims independently to lane-dense multiples of 128 and stack
    the hidden layers.  Zero padding is semantics-preserving (relu(0)=0).

    weight_dtype=jnp.bfloat16 enables the bf16-operand path (f32 accumulation kept).
    """
    n_linears = len(params)
    assert n_linears >= 2
    hidden_size = params[0][0].shape[1]
    output_size = params[-1][0].shape[1]

    # TODO(synk): on v6e/v7x, pad real (>=128) dims to multiples of 256 to fill the
    # 256x256 MXU when compute-bound; 128 is right for v5e and for tiny dims.
    Pin = _round_up(input_size, 128)
    Ph = _round_up(hidden_size, 128)
    Pout = _round_up(output_size, 128)

    def pad2(a, rows, cols, dtype):
        return jnp.zeros((rows, cols), dtype).at[: a.shape[0], : a.shape[1]].set(
            a.astype(dtype))

    w_first = pad2(params[0][0], Pin, Ph, weight_dtype)
    b_first = pad2(params[0][1], 1, Ph, jnp.float32)
    w_last = pad2(params[-1][0], Ph, Pout, weight_dtype)
    b_last = pad2(params[-1][1], 1, Pout, jnp.float32)

    n_hidden = n_linears - 2
    if n_hidden > 0:
        w_hidden = jnp.stack([pad2(params[i][0], Ph, Ph, weight_dtype)
                              for i in range(1, n_linears - 1)])
        b_hidden = jnp.stack([pad2(params[i][1], 1, Ph, jnp.float32)
                              for i in range(1, n_linears - 1)])
    else:
        w_hidden = b_hidden = None

    return dict(
        input_size=input_size, hidden_size=hidden_size, output_size=output_size,
        Pin=Pin, Ph=Ph, Pout=Pout, n_hidden=n_hidden,
        w_first=w_first, b_first=b_first,
        w_hidden=w_hidden, b_hidden=b_hidden,
        w_last=w_last, b_last=b_last,
    )


def _choose_tm(M):
    """Waste-aware M tile.  For M > 512 this always yields >= 2 grid steps so the
    'parallel' axis can use both v7x TensorCores; large tiles amortize the ~0.35us
    per-grid-step overhead on v5e/v6e."""
    if M <= 512:
        return _round_up(max(M, 1), 8)
    candidates = (512, 384, 256)
    return min(candidates, key=lambda t: (_round_up(M, t) - M, -t))


def multi_linear_forward(x, packed):
    """x: (..., input_size) -> (..., output_size). relu between layers, none on last."""
    in_features = packed["input_size"]
    out_features = packed["output_size"]
    Pin, Pout = packed["Pin"], packed["Pout"]

    lead_shape = x.shape[:-1]
    x2d = x.reshape(-1, in_features)
    M = x2d.shape[0]
    tm = _choose_tm(M)
    Mp = _round_up(M, tm)

    # Skip the host-side materialized pad (an extra HBM pass) when already aligned.
    if Mp == M and in_features == Pin:
        x_in = x2d
    else:
        x_in = jnp.zeros((Mp, Pin), x2d.dtype).at[:M, :in_features].set(x2d)

    y = fused_mlp_pallas(x_in, packed, tm=tm)

    if Mp != M or Pout != out_features:  # skip the slice when output is exact
        y = y[:M, :out_features]
    return y.reshape(*lead_shape, out_features)


def multi_linear_reference(x, params):
    x2d = x.reshape(-1, x.shape[-1]).astype(jnp.float32)
    n = len(params)
    for li, (w, b) in enumerate(params):
        x2d = x2d @ w + b
        if li < n - 1:
            x2d = jnp.maximum(x2d, 0.0)  # activation="relu"
    return x2d.reshape(*x.shape[:-1], x2d.shape[-1])


# ----------------------------- demo / self-check -----------------------------

if __name__ == "__main__":
    key = jax.random.PRNGKey(0)

    # MultiLinearLayer(n_layers=3, input_size=32, hidden_size=32, output_size=16,
    #                  activation="relu");  x: (batch=2, seq=8, 32) -> (2, 8, 16)
    n_layers, input_size, hidden_size, output_size = 3, 32, 32, 16
    batch, seq = 2, 8

    kx, kp = jax.random.split(key)
    x = jax.random.normal(kx, (batch, seq, input_size), jnp.float32)
    params = init_multi_linear_params(kp, n_layers, input_size, hidden_size, output_size)
    ref = multi_linear_reference(x, params)

    # f32 path (matches the PyTorch module's numerics).
    packed_f32 = pack_multi_linear_params(params, input_size)
    out = jax.block_until_ready(multi_linear_forward(x, packed_f32))
    assert out.shape == (batch, seq, output_size)
    assert jnp.allclose(out, ref, atol=1e-5, rtol=1e-5)

    # bf16-operand path (v6e/v7x bandwidth/MXU win); f32 accumulation kept.
    packed_bf16 = pack_multi_linear_params(params, input_size, weight_dtype=jnp.bfloat16)
    out_bf16 = jax.block_until_ready(multi_linear_forward(x, packed_bf16))
    assert out_bf16.shape == (batch, seq, output_size)
    assert jnp.allclose(out_bf16, ref, atol=5e-2, rtol=5e-2)

    print("KERNEL_OK")
</pallas_src>

<mosaic_0001>
module attributes {stable_mosaic.version = 11 : i64} {
  func.func @kernel(%arg0: i32, %arg1: memref<16x128xf32, #tpu.memory_space<vmem>>, %arg2: memref<128x128xf32, #tpu.memory_space<vmem>>, %arg3: memref<1x128xf32, #tpu.memory_space<vmem>>, %arg4: memref<1x128x128xf32, #tpu.memory_space<vmem>>, %arg5: memref<1x1x128xf32, #tpu.memory_space<vmem>>, %arg6: memref<128x128xf32, #tpu.memory_space<vmem>>, %arg7: memref<1x128xf32, #tpu.memory_space<vmem>>, %arg8: memref<16x128xf32, #tpu.memory_space<vmem>>) attributes {dimension_semantics = [#tpu.dimension_semantics<parallel>], iteration_bounds = array<i64: 1>, scalar_prefetch = 0 : i64, scratch_operands = 0 : i64, tpu.core_type = #tpu.core_type<tc>, window_params = [{transform_indices = @transform_0, window_bounds = array<i64: 16, 128>}, {pipeline_mode = #tpu.pipeline_mode<synchronous>, transform_indices = @transform_1, window_bounds = array<i64: 128, 128>}, {pipeline_mode = #tpu.pipeline_mode<synchronous>, transform_indices = @transform_2, window_bounds = array<i64: 1, 128>}, {pipeline_mode = #tpu.pipeline_mode<synchronous>, transform_indices = @transform_3, window_bounds = array<i64: 1, 128, 128>}, {pipeline_mode = #tpu.pipeline_mode<synchronous>, transform_indices = @transform_4, window_bounds = array<i64: 1, 1, 128>}, {pipeline_mode = #tpu.pipeline_mode<synchronous>, transform_indices = @transform_5, window_bounds = array<i64: 128, 128>}, {pipeline_mode = #tpu.pipeline_mode<synchronous>, transform_indices = @transform_6, window_bounds = array<i64: 1, 128>}, {transform_indices = @transform_7, window_bounds = array<i64: 16, 128>}]} {
    %c0 = arith.constant 0 : index
    %c0_0 = arith.constant 0 : index
    %0 = vector.load %arg1[%c0, %c0_0] : memref<16x128xf32, #tpu.memory_space<vmem>>, vector<16x128xf32>
    %c0_1 = arith.constant 0 : index
    %c0_2 = arith.constant 0 : index
    %1 = vector.load %arg2[%c0_1, %c0_2] : memref<128x128xf32, #tpu.memory_space<vmem>>, vector<128x128xf32>
    %c0_3 = arith.constant 0 : index
    %c0_4 = arith.constant 0 : index
    %2 = vector.load %arg3[%c0_3, %c0_4] : memref<1x128xf32, #tpu.memory_space<vmem>>, vector<1x128xf32>
    %cst = arith.constant dense<0.000000e+00> : vector<16x128xf32>
    %3 = tpu.matmul %0, %1, %cst {dimension_numbers = #tpu.dot_dimension_numbers<[1], [0], [0], [1], [0, 0, 1, 1], [], []>} : vector<16x128xf32>, vector<128x128xf32>, vector<16x128xf32> -> vector<16x128xf32>
    %4 = vector.broadcast %2 : vector<1x128xf32> to vector<16x128xf32>
    %5 = arith.addf %3, %4 : vector<16x128xf32>
    %cst_5 = arith.constant 0.000000e+00 : f32
    %6 = vector.broadcast %cst_5 : f32 to vector<16x128xf32>
    %7 = arith.maximumf %5, %6 : vector<16x128xf32>
    %c0_6 = arith.constant 0 : index
    %c0_7 = arith.constant 0 : index
    %c0_8 = arith.constant 0 : index
    %8 = vector.load %arg4[%c0_6, %c0_7, %c0_8] : memref<1x128x128xf32, #tpu.memory_space<vmem>>, vector<1x128x128xf32>
    %9 = vector.shape_cast %8 : vector<1x128x128xf32> to vector<128x128xf32>
    %c0_9 = arith.constant 0 : index
    %c0_10 = arith.constant 0 : index
    %c0_11 = arith.constant 0 : index
    %10 = vector.load %arg5[%c0_9, %c0_10, %c0_11] : memref<1x1x128xf32, #tpu.memory_space<vmem>>, vector<1x1x128xf32>
    %11 = vector.shape_cast %10 : vector<1x1x128xf32> to vector<1x128xf32>
    %cst_12 = arith.constant dense<0.000000e+00> : vector<16x128xf32>
    %12 = tpu.matmul %7, %9, %cst_12 {dimension_numbers = #tpu.dot_dimension_numbers<[1], [0], [0], [1], [0, 0, 1, 1], [], []>} : vector<16x128xf32>, vector<128x128xf32>, vector<16x128xf32> -> vector<16x128xf32>
    %13 = vector.broadcast %11 : vector<1x128xf32> to vector<16x128xf32>
    %14 = arith.addf %12, %13 : vector<16x128xf32>
    %cst_13 = arith.constant 0.000000e+00 : f32
    %15 = vector.broadcast %cst_13 : f32 to vector<16x128xf32>
    %16 = arith.maximumf %14, %15 : vector<16x128xf32>
    %c0_14 = arith.constant 0 : index
    %c0_15 = arith.constant 0 : index
    %17 = vector.load %arg6[%c0_14, %c0_15] : memref<128x128xf32, #tpu.memory_space<vmem>>, vector<128x128xf32>
    %c0_16 = arith.constant 0 : index
    %c0_17 = arith.constant 0 : index
    %18 = vector.load %arg7[%c0_16, %c0_17] : memref<1x128xf32, #tpu.memory_space<vmem>>, vector<1x128xf32>
    %cst_18 = arith.constant dense<0.000000e+00> : vector<16x128xf32>
    %19 = tpu.matmul %16, %17, %cst_18 {dimension_numbers = #tpu.dot_dimension_numbers<[1], [0], [0], [1], [0, 0, 1, 1], [], []>} : vector<16x128xf32>, vector<128x128xf32>, vector<16x128xf32> -> vector<16x128xf32>
    %20 = vector.broadcast %18 : vector<1x128xf32> to vector<16x128xf32>
    %21 = arith.addf %19, %20 : vector<16x128xf32>
    %c0_19 = arith.constant 0 : index
    %c0_20 = arith.constant 0 : index
    %22 = vector.load %arg8[%c0_19, %c0_20] : memref<16x128xf32, #tpu.memory_space<vmem>>, vector<16x128xf32>
    tpu.vector_store %arg8[%c0_19, %c0_20], %21 {strides = array<i32>} : memref<16x128xf32, #tpu.memory_space<vmem>>, vector<16x128xf32>,
    return
  }
  func.func @transform_0(%arg0: i32) -> (i32, i32) {
    %c0_i32 = arith.constant 0 : i32
    %c0_i32_0 = arith.constant 0 : i32
    return %arg0, %c0_i32 : i32, i32
  }
  func.func @transform_1(%arg0: i32) -> (i32, i32) {
    %c0_i32 = arith.constant 0 : i32
    %c0_i32_0 = arith.constant 0 : i32
    %c0_i32_1 = arith.constant 0 : i32
    return %c0_i32, %c0_i32_0 : i32, i32
  }
  func.func @transform_2(%arg0: i32) -> (i32, i32) {
    %c0_i32 = arith.constant 0 : i32
    %c0_i32_0 = arith.constant 0 : i32
    %c0_i32_1 = arith.constant 0 : i32
    return %c0_i32, %c0_i32_0 : i32, i32
  }
  func.func @transform_3(%arg0: i32) -> (i32, i32, i32) {
    %c0_i32 = arith.constant 0 : i32
    %c0_i32_0 = arith.constant 0 : i32
    %c0_i32_1 = arith.constant 0 : i32
    %c0_i32_2 = arith.constant 0 : i32
    return %c0_i32, %c0_i32_0, %c0_i32_1 : i32, i32, i32
  }
  func.func @transform_4(%arg0: i32) -> (i32, i32, i32) {
    %c0_i32 = arith.constant 0 : i32
    %c0_i32_0 = arith.constant 0 : i32
    %c0_i32_1 = arith.constant 0 : i32
    %c0_i32_2 = arith.constant 0 : i32
    return %c0_i32, %c0_i32_0, %c0_i32_1 : i32, i32, i32
  }
  func.func @transform_5(%arg0: i32) -> (i32, i32) {
    %c0_i32 = arith.constant 0 : i32
    %c0_i32_0 = arith.constant 0 : i32
    %c0_i32_1 = arith.constant 0 : i32
    return %c0_i32, %c0_i32_0 : i32, i32
  }
  func.func @transform_6(%arg0: i32) -> (i32, i32) {
    %c0_i32 = arith.constant 0 : i32
    %c0_i32_0 = arith.constant 0 : i32
    %c0_i32_1 = arith.constant 0 : i32
    return %c0_i32, %c0_i32_0 : i32, i32
  }
  func.func @transform_7(%arg0: i32) -> (i32, i32) {
    %c0_i32 = arith.constant 0 : i32
    %c0_i32_0 = arith.constant 0 : i32
    return %arg0, %c0_i32 : i32, i32
  }
}

module attributes {stable_mosaic.version = 11 : i64} {
  func.func @kernel(%arg0: i32, %arg1: memref<16x128xf32, #tpu.memory_space<vmem>>, %arg2: memref<128x128xf32, #tpu.memory_space<vmem>>, %arg3: memref<1x128xf32, #tpu.memory_space<vmem>>, %arg4: memref<1x128x128xf32, #tpu.memory_space<vmem>>, %arg5: memref<1x1x128xf32, #tpu.memory_space<vmem>>, %arg6: memref<128x128xf32, #tpu.memory_space<vmem>>, %arg7: memref<1x128xf32, #tpu.memory_space<vmem>>, %arg8: memref<16x128xf32, #tpu.memory_space<vmem>>) attributes {dimension_semantics = [#tpu.dimension_semantics<parallel>], iteration_bounds = array<i64: 1>, scalar_prefetch = 0 : i64, scratch_operands = 0 : i64, tpu.core_type = #tpu.core_type<tc>, window_params = [{transform_indices = @transform_0, window_bounds = array<i64: 16, 128>}, {pipeline_mode = #tpu.pipeline_mode<synchronous>, transform_indices = @transform_1, window_bounds = array<i64: 128, 128>}, {pipeline_mode = #tpu.pipeline_mode<synchronous>, transform_indices = @transform_2, window_bounds = array<i64: 1, 128>}, {pipeline_mode = #tpu.pipeline_mode<synchronous>, transform_indices = @transform_3, window_bounds = array<i64: 1, 128, 128>}, {pipeline_mode = #tpu.pipeline_mode<synchronous>, transform_indices = @transform_4, window_bounds = array<i64: 1, 1, 128>}, {pipeline_mode = #tpu.pipeline_mode<synchronous>, transform_indices = @transform_5, window_bounds = array<i64: 128, 128>}, {pipeline_mode = #tpu.pipeline_mode<synchronous>, transform_indices = @transform_6, window_bounds = array<i64: 1, 128>}, {transform_indices = @transform_7, window_bounds = array<i64: 16, 128>}]} {
    %c0 = arith.constant 0 : index
    %c0_0 = arith.constant 0 : index
    %0 = vector.load %arg1[%c0, %c0_0] : memref<16x128xf32, #tpu.memory_space<vmem>>, vector<16x128xf32>
    %c0_1 = arith.constant 0 : index
    %c0_2 = arith.constant 0 : index
    %1 = vector.load %arg2[%c0_1, %c0_2] : memref<128x128xf32, #tpu.memory_space<vmem>>, vector<128x128xf32>
    %c0_3 = arith.constant 0 : index
    %c0_4 = arith.constant 0 : index
    %2 = vector.load %arg3[%c0_3, %c0_4] : memref<1x128xf32, #tpu.memory_space<vmem>>, vector<1x128xf32>
    %cst = arith.constant dense<0.000000e+00> : vector<16x128xf32>
    %3 = tpu.matmul %0, %1, %cst {dimension_numbers = #tpu.dot_dimension_numbers<[1], [0], [0], [1], [0, 0, 1, 1], [], []>} : vector<16x128xf32>, vector<128x128xf32>, vector<16x128xf32> -> vector<16x128xf32>
    %4 = vector.broadcast %2 : vector<1x128xf32> to vector<16x128xf32>
    %5 = arith.addf %3, %4 : vector<16x128xf32>
    %cst_5 = arith.constant 0.000000e+00 : f32
    %6 = vector.broadcast %cst_5 : f32 to vector<16x128xf32>
    %7 = arith.maximumf %5, %6 : vector<16x128xf32>
    %c0_6 = arith.constant 0 : index
    %c0_7 = arith.constant 0 : index
    %c0_8 = arith.constant 0 : index
    %8 = vector.load %arg4[%c0_6, %c0_7, %c0_8] : memref<1x128x128xf32, #tpu.memory_space<vmem>>, vector<1x128x128xf32>
    %9 = vector.shape_cast %8 : vector<1x128x128xf32> to vector<128x128xf32>
    %c0_9 = arith.constant 0 : index
    %c0_10 = arith.constant 0 : index
    %c0_11 = arith.constant 0 : index
    %10 = vector.load %arg5[%c0_9, %c0_10, %c0_11] : memref<1x1x128xf32, #tpu.memory_space<vmem>>, vector<1x1x128xf32>
    %11 = vector.shape_cast %10 : vector<1x1x128xf32> to vector<1x128xf32>
    %cst_12 = arith.constant dense<0.000000e+00> : vector<16x128xf32>
    %12 = tpu.matmul %7, %9, %cst_12 {dimension_numbers = #tpu.dot_dimension_numbers<[1], [0], [0], [1], [0, 0, 1, 1], [], []>} : vector<16x128xf32>, vector<128x128xf32>, vector<16x128xf32> -> vector<16x128xf32>
    %13 = vector.broadcast %11 : vector<1x128xf32> to vector<16x128xf32>
    %14 = arith.addf %12, %13 : vector<16x128xf32>
    %cst_13 = arith.constant 0.000000e+00 : f32
    %15 = vector.broadcast %cst_13 : f32 to vector<16x128xf32>
    %16 = arith.maximumf %14, %15 : vector<16x128xf32>
    %c0_14 = arith.constant 0 : index
    %c0_15 = arith.constant 0 : index
    %17 = vector.load %arg6[%c0_14, %c0_15] : memref<128x128xf32, #tpu.memory_space<vmem>>, vector<128x128xf32>
    %c0_16 = arith.constant 0 : index
    %c0_17 = arith.constant 0 : index
    %18 = vector.load %arg7[%c0_16, %c0_17] : memref<1x128xf32, #tpu.memory_space<vmem>>, vector<1x128xf32>
    %cst_18 = arith.constant dense<0.000000e+00> : vector<16x128xf32>
    %19 = tpu.matmul %16, %17, %cst_18 {dimension_numbers = #tpu.dot_dimension_numbers<[1], [0], [0], [1], [0, 0, 1, 1], [], []>} : vector<16x128xf32>, vector<128x128xf32>, vector<16x128xf32> -> vector<16x128xf32>
    %20 = vector.broadcast %18 : vector<1x128xf32> to vector<16x128xf32>
    %21 = arith.addf %19, %20 : vector<16x128xf32>
    %c0_19 = arith.constant 0 : index
    %c0_20 = arith.constant 0 : index
    %22 = vector.load %arg8[%c0_19, %c0_20] : memref<16x128xf32, #tpu.memory_space<vmem>>, vector<16x128xf32>
    tpu.vector_store %arg8[%c0_19, %c0_20], %21 {strides = array<i32>} : memref<16x128xf32, #tpu.memory_space<vmem>>, vector<16x128xf32>,
    return
  }
  func.func @transform_0(%arg0: i32) -> (i32, i32) {
    %c0_i32 = arith.constant 0 : i32
    %c0_i32_0 = arith.constant 0 : i32
    return %arg0, %c0_i32 : i32, i32
  }
  func.func @transform_1(%arg0: i32) -> (i32, i32) {
    %c0_i32 = arith.constant 0 : i32
    %c0_i32_0 = arith.constant 0 : i32
    %c0_i32_1 = arith.constant 0 : i32
    return %c0_i32, %c0_i32_0 : i32, i32
  }
  func.func @transform_2(%arg0: i32) -> (i32, i32) {
    %c0_i32 = arith.constant 0 : i32
    %c0_i32_0 = arith.constant 0 : i32
    %c0_i32_1 = arith.constant 0 : i32
    return %c0_i32, %c0_i32_0 : i32, i32
  }
  func.func @transform_3(%arg0: i32) -> (i32, i32, i32) {
    %c0_i32 = arith.constant 0 : i32
    %c0_i32_0 = arith.constant 0 : i32
    %c0_i32_1 = arith.constant 0 : i32
    %c0_i32_2 = arith.constant 0 : i32
    return %c0_i32, %c0_i32_0, %c0_i32_1 : i32, i32, i32
  }
  func.func @transform_4(%arg0: i32) -> (i32, i32, i32) {
    %c0_i32 = arith.constant 0 : i32
    %c0_i32_0 = arith.constant 0 : i32
    %c0_i32_1 = arith.constant 0 : i32
    %c0_i32_2 = arith.constant 0 : i32
    return %c0_i32, %c0_i32_0, %c0_i32_1 : i32, i32, i32
  }
  func.func @transform_5(%arg0: i32) -> (i32, i32) {
    %c0_i32 = arith.constant 0 : i32
    %c0_i32_0 = arith.constant 0 : i32
    %c0_i32_1 = arith.constant 0 : i32
    return %c0_i32, %c0_i32_0 : i32, i32
  }
  func.func @transform_6(%arg0: i32) -> (i32, i32) {
    %c0_i32 = arith.constant 0 : i32
    %c0_i32_0 = arith.constant 0 : i32
    %c0_i32_1 = arith.constant 0 : i32
    return %c0_i32, %c0_i32_0 : i32, i32
  }
  func.func @transform_7(%arg0: i32) -> (i32, i32) {
    %c0_i32 = arith.constant 0 : i32
    %c0_i32_0 = arith.constant 0 : i32
    return %arg0, %c0_i32 : i32, i32
  }
}

</mosaic_0001>

<llo_original>
// kernel: tpu_custom_call.1
$region0: #{tpu_custom_call.1}
  #allocation0 [shape = 'u32[]', space=smem, size = 0x4, offset = 0x4, fixed_abs, tag = 'smem constant byte address 0x4 - core index']
  #allocation1 [shape = 'u32[144,128]{1,0:T(1,128)}', space=vmem, size = 0x12000, scoped, tag = 'internal scratch']
  %s0 = inlined_call_operand.hbm [shape: f32[16,128], index: 0, kind: input, shape index: {}]
  %s1 = inlined_call_operand.hbm [shape: f32[128,128], index: 1, kind: input, shape index: {}]
  %s2 = inlined_call_operand.vmem [shape: f32[1,128], index: 2, kind: input, shape index: {}]
  %s3 = inlined_call_operand.hbm [shape: f32[1,128,128], index: 3, kind: input, shape index: {}]
  %s4 = inlined_call_operand.vmem [shape: f32[1,1,128], index: 4, kind: input, shape index: {}]
  %s5 = inlined_call_operand.hbm [shape: f32[128,128], index: 5, kind: input, shape index: {}]
  %s6 = inlined_call_operand.vmem [shape: f32[1,128], index: 6, kind: input, shape index: {}]
  %s7 = inlined_call_operand.hbm [shape: f32[16,128], index: 7, kind: output, shape index: {}]
  %s8 = sld [smem:[#allocation0]]
  $region54: #{tpu_custom_call.1} parent=0
    _
  %s10 = ssub.s32 1, %s8
  %s11 = scalar_select 0, %s10, %s8
  $region1: #{tpu_custom_call.1} parent=0
    #allocation2 [shape = 'u8[8192]{0}', space=vmem, size = 0x2000, scoped, tag = 'input window, operand 0, single buffered']
    #allocation3 [shape = 's32[1]{0}', space=sflag, size = 0x4, scoped, tag = 'scoped memory for tpu_custom_call.1']
    #allocation4 [shape = 's32[1]{0}', space=sflag, size = 0x4, scoped, tag = 'scoped memory for tpu_custom_call.1']
    #allocation5 [shape = 'u8[65536]{0}', space=vmem, size = 0x10000, scoped, tag = 'input window, operand 1, single buffered']
    #allocation6 [shape = 's32[1]{0}', space=sflag, size = 0x4, scoped, tag = 'scoped memory for tpu_custom_call.1']
    #allocation7 [shape = 'u8[65536]{0}', space=vmem, size = 0x10000, scoped, tag = 'input window, operand 3, single buffered']
    #allocation8 [shape = 'u8[65536]{0}', space=vmem, size = 0x10000, scoped, tag = 'input window, operand 5, single buffered']
    #allocation9 [shape = 's32[1]{0}', space=sflag, size = 0x4, scoped, tag = 'scoped memory for tpu_custom_call.1']
    #allocation10 [shape = 'u8[8192]{0}', space=vmem, size = 0x2000, scoped, tag = 'output window, operand 0, single buffered']
    %12 = vsyncpa [#allocation3], 0
    %13 = vsyncpa [#allocation6], 0
    %14 = vsyncpa [#allocation9], 0
    %15 = vsyncpa [#allocation4], 0
    // Predicated region
    $region2: #{tpu_custom_call.1} parent=1 // pred_check
      _
    $region3: #{tpu_custom_call.1} parent=1 // pred_check_branch
      %17 = sbr.rel (0) target = $region5
    $region4: #{tpu_custom_call.1} parent=1 // pred_region
      %s19 = ssub.s32 256, 256
      %20 = vsyncadd [#allocation3], %s19
      %s21 = sshll.u32 [#allocation2], 4
      %s22 = int_to_ptr.vmem [resolvable:$true] %s21
      %27 = dma.hbm_to_vmem [thread:$0]  %s0, 256, %s22, [#allocation3], 128, 128, 8
    $region5: #{tpu_custom_call.1} parent=1 // pred_fallthru
      _
    // Predicated region
    $region6: #{tpu_custom_call.1} parent=1 // pred_check
      _
    $region7: #{tpu_custom_call.1} parent=1 // pred_check_branch
      %29 = sbr.rel (0) target = $region9
    $region8: #{tpu_custom_call.1} parent=1 // pred_region
      %s31 = ssub.s32 2048, 2048
      %32 = vsyncadd [#allocation6], %s31
      %s33 = sshll.u32 [#allocation5], 4
      %s34 = int_to_ptr.vmem [resolvable:$true] %s33
      %39 = dma.hbm_to_vmem [thread:$0]  %s1, 2048, %s34, [#allocation6], 128, 128, 8
    $region9: #{tpu_custom_call.1} parent=1 // pred_fallthru
      _
    // Predicated region
    $region10: #{tpu_custom_call.1} parent=1 // pred_check
      _
    $region11: #{tpu_custom_call.1} parent=1 // pred_check_branch
      %41 = sbr.rel (0) target = $region13
    $region12: #{tpu_custom_call.1} parent=1 // pred_region
      _
    $region13: #{tpu_custom_call.1} parent=1 // pred_fallthru
      _
    // Predicated region
    $region14: #{tpu_custom_call.1} parent=1 // pred_check
      _
    $region15: #{tpu_custom_call.1} parent=1 // pred_check_branch
      %43 = sbr.rel (0) target = $region17
    $region16: #{tpu_custom_call.1} parent=1 // pred_region
      %s45 = ssub.s32 2048, 2048
      %46 = vsyncadd [#allocation6], %s45
      %s47 = sshll.u32 [#allocation7], 4
      %s48 = int_to_ptr.vmem [resolvable:$true] %s47
      %53 = dma.hbm_to_vmem [thread:$0]  %s3, 2048, %s48, [#allocation6], 128, 128, 8
    $region17: #{tpu_custom_call.1} parent=1 // pred_fallthru
      _
    // Predicated region
    $region18: #{tpu_custom_call.1} parent=1 // pred_check
      _
    $region19: #{tpu_custom_call.1} parent=1 // pred_check_branch
      %55 = sbr.rel (0) target = $region21
    $region20: #{tpu_custom_call.1} parent=1 // pred_region
      _
    $region21: #{tpu_custom_call.1} parent=1 // pred_fallthru
      _
    // Predicated region
    $region22: #{tpu_custom_call.1} parent=1 // pred_check
      _
    $region23: #{tpu_custom_call.1} parent=1 // pred_check_branch
      %57 = sbr.rel (0) target = $region25
    $region24: #{tpu_custom_call.1} parent=1 // pred_region
      %s59 = ssub.s32 2048, 2048
      %60 = vsyncadd [#allocation9], %s59
      %s61 = sshll.u32 [#allocation8], 4
      %s62 = int_to_ptr.vmem [resolvable:$true] %s61
      %67 = dma.hbm_to_vmem [thread:$0]  %s5, 2048, %s62, [#allocation9], 128, 128, 8
    $region25: #{tpu_custom_call.1} parent=1 // pred_fallthru
      _
    // Predicated region
    $region26: #{tpu_custom_call.1} parent=1 // pred_check
      _
    $region27: #{tpu_custom_call.1} parent=1 // pred_check_branch
      %69 = sbr.rel (0) target = $region29
    $region28: #{tpu_custom_call.1} parent=1 // pred_region
      _
    $region29: #{tpu_custom_call.1} parent=1 // pred_fallthru
      _
    // Predicated region
    $region30: #{tpu_custom_call.1} parent=1 // pred_check
      _
    $region31: #{tpu_custom_call.1} parent=1 // pred_check_branch
      %71 = sbr.rel (0) target = $region33
    $region32: #{tpu_custom_call.1} parent=1 // pred_region
      %72 = dma.done [#allocation3], 256
    $region33: #{tpu_custom_call.1} parent=1 // pred_fallthru
      _
    // Predicated region
    $region34: #{tpu_custom_call.1} parent=1 // pred_check
      _
    $region35: #{tpu_custom_call.1} parent=1 // pred_check_branch
      %74 = sbr.rel (0) target = $region37
    $region36: #{tpu_custom_call.1} parent=1 // pred_region
      %75 = dma.done [#allocation6], 2048
    $region37: #{tpu_custom_call.1} parent=1 // pred_fallthru
      _
    // Predicated region
    $region38: #{tpu_custom_call.1} parent=1 // pred_check
      _
    $region39: #{tpu_custom_call.1} parent=1 // pred_check_branch
      %77 = sbr.rel (0) target = $region41
    $region40: #{tpu_custom_call.1} parent=1 // pred_region
      %78 = dma.done [#allocation6], 2048
    $region41: #{tpu_custom_call.1} parent=1 // pred_fallthru
      _
    // Predicated region
    $region42: #{tpu_custom_call.1} parent=1 // pred_check
      _
    $region43: #{tpu_custom_call.1} parent=1 // pred_check_branch
      %80 = sbr.rel (0) target = $region45
    $region44: #{tpu_custom_call.1} parent=1 // pred_region
      %81 = dma.done [#allocation9], 2048
    $region45: #{tpu_custom_call.1} parent=1 // pred_fallthru
      _
    %v82 = vld [vmem:[#allocation2] sm:$0xff]
    %v83 = vld [vmem:[#allocation2 + $0x8] sm:$0xff]
    %v84 = vld [vmem:[#allocation5] sm:$0xff]
    %v85 = vld [vmem:[#allocation5 + $0x8] sm:$0xff]
    %v86 = vld [vmem:[#allocation5 + $0x10] sm:$0xff]
    %v87 = vld [vmem:[#allocation5 + $0x18] sm:$0xff]
    %v88 = vld [vmem:[#allocation5 + $0x20] sm:$0xff]
    %v89 = vld [vmem:[#allocation5 + $0x28] sm:$0xff]
    %v90 = vld [vmem:[#allocation5 + $0x30] sm:$0xff]
    %v91 = vld [vmem:[#allocation5 + $0x38] sm:$0xff]
    %v92 = vld [vmem:[#allocation5 + $0x40] sm:$0xff]
    %v93 = vld [vmem:[#allocation5 + $0x48] sm:$0xff]
    %v94 = vld [vmem:[#allocation5 + $0x50] sm:$0xff]
    %v95 = vld [vmem:[#allocation5 + $0x58] sm:$0xff]
    %v96 = vld [vmem:[#allocation5 + $0x60] sm:$0xff]
    %v97 = vld [vmem:[#allocation5 + $0x68] sm:$0xff]
    %v98 = vld [vmem:[#allocation5 + $0x70] sm:$0xff]
    %v99 = vld [vmem:[#allocation5 + $0x78] sm:$0xff]
    %v100 = vld [vmem:[%s2] sm:$0x1]
    %v102 = vlaneseq
    %v103 = vshrl.u32 %v102, 7
    %v104 = vsub.s32 0, %v103
    %v105 = vrot.slane %v100, %v104
    %107 = vmatprep.subr.mxu0 0.0
    %108 = vmatpush1.msra.mxu0 %v84
    %109 = vmatprep.subr.mxu0 0.0
    %110 = vmatpush1.msra.mxu0 %v85
    %111 = vmatprep.subr.mxu0 0.0
    %112 = vmatpush1.msra.mxu0 %v86
    %113 = vmatprep.subr.mxu0 0.0
    %114 = vmatpush1.msra.mxu0 %v87
    %115 = vmatprep.subr.mxu0 0.0
    %116 = vmatpush1.msra.mxu0 %v88
    %117 = vmatprep.subr.mxu0 0.0
    %118 = vmatpush1.msra.mxu0 %v89
    %119 = vmatprep.subr.mxu0 0.0
    %120 = vmatpush1.msra.mxu0 %v90
    %121 = vmatprep.subr.mxu0 0.0
    %122 = vmatpush1.msra.mxu0 %v91
    %123 = vmatprep.subr.mxu0 0.0
    %124 = vmatpush1.msra.mxu0 %v92
    %125 = vmatprep.subr.mxu0 0.0
    %126 = vmatpush1.msra.mxu0 %v93
    %127 = vmatprep.subr.mxu0 0.0
    %128 = vmatpush1.msra.mxu0 %v94
    %129 = vmatprep.subr.mxu0 0.0
    %130 = vmatpush1.msra.mxu0 %v95
    %131 = vmatprep.subr.mxu0 0.0
    %132 = vmatpush1.msra.mxu0 %v96
    %133 = vmatprep.subr.mxu0 0.0
    %134 = vmatpush1.msra.mxu0 %v97
    %135 = vmatprep.subr.mxu0 0.0
    %136 = vmatpush1.msra.mxu0 %v98
    %137 = vmatprep.subr.mxu0 0.0
    %138 = vmatpush1.msra.mxu0 %v99
    %139 = vmatprep.subr.mxu0 0.0
    %140 = vmatpush1.msra.mxu0 0.0
    %141 = vmatprep.subr.mxu0 0.0
    %142 = vmatpush1.msra.mxu0 0.0
    %143 = vmatprep.subr.mxu0 0.0
    %144 = vmatpush1.msra.mxu0 0.0
    %145 = vmatprep.subr.mxu0 0.0
    %146 = vmatpush1.msra.mxu0 0.0
    %147 = vmatprep.subr.mxu0 0.0
    %148 = vmatpush1.msra.mxu0 0.0
    %149 = vmatprep.subr.mxu0 0.0
    %150 = vmatpush1.msra.mxu0 0.0
    %151 = vmatprep.subr.mxu0 0.0
    %152 = vmatpush1.msra.mxu0 0.0
    %153 = vmatprep.subr.mxu0 0.0
    %154 = vmatpush1.msra.mxu0 0.0
    %155 = vmatprep.subr.mxu0 0.0
    %156 = vmatpush1.msra.mxu0 0.0
    %157 = vmatprep.subr.mxu0 0.0
    %158 = vmatpush1.msra.mxu0 0.0
    %159 = vmatprep.subr.mxu0 0.0
    %160 = vmatpush1.msra.mxu0 0.0
    %161 = vmatprep.subr.mxu0 0.0
    %162 = vmatpush1.msra.mxu0 0.0
    %163 = vmatprep.subr.mxu0 0.0
    %164 = vmatpush1.msra.mxu0 0.0
    %165 = vmatprep.subr.mxu0 0.0
    %166 = vmatpush1.msra.mxu0 0.0
    %167 = vmatprep.subr.mxu0 0.0
    %168 = vmatpush1.msra.mxu0 0.0
    %169 = vmatprep.subr.mxu0 0.0
    %170 = vmatpush1.msra.mxu0 0.0
    %171 = vmatprep.mubr.f32.mxu0 0.0
    %172 = vmatmul.mubr.f32.gmra.mrb[0].mxu0 %v82
    %v173 = vpop.f32.mrb[0].mxu0
    %v174 = vadd.f32 %v105, %v173
    %v175 = vpop.f32.mrb[0].mxu0
    %176 = vmatprep.mubr.f32.mxu0 0.0
    %177 = vmatmul.mubr.f32.gmra.mrb[0].mxu0 %v83
    %v178 = vpop.f32.mrb[0].mxu0
    %v179 = vadd.f32 %v105, %v178
    %v180 = vpop.f32.mrb[0].mxu0
    %181 = vdwg.mxu0
    %v182 = vmax.f32 %v174, 0.0
    %v183 = vmax.f32 %v179, 0.0
    %v184 = vld [vmem:[#allocation7] sm:$0xff]
    %v185 = vld [vmem:[#allocation7 + $0x8] sm:$0xff]
    %v186 = vld [vmem:[#allocation7 + $0x10] sm:$0xff]
    %v187 = vld [vmem:[#allocation7 + $0x18] sm:$0xff]
    %v188 = vld [vmem:[#allocation7 + $0x20] sm:$0xff]
    %v189 = vld [vmem:[#allocation7 + $0x28] sm:$0xff]
    %v190 = vld [vmem:[#allocation7 + $0x30] sm:$0xff]
    %v191 = vld [vmem:[#allocation7 + $0x38] sm:$0xff]
    %v192 = vld [vmem:[#allocation7 + $0x40] sm:$0xff]
    %v193 = vld [vmem:[#allocation7 + $0x48] sm:$0xff]
    %v194 = vld [vmem:[#allocation7 + $0x50] sm:$0xff]
    %v195 = vld [vmem:[#allocation7 + $0x58] sm:$0xff]
    %v196 = vld [vmem:[#allocation7 + $0x60] sm:$0xff]
    %v197 = vld [vmem:[#allocation7 + $0x68] sm:$0xff]
    %v198 = vld [vmem:[#allocation7 + $0x70] sm:$0xff]
    %v199 = vld [vmem:[#allocation7 + $0x78] sm:$0xff]
    %v200 = vld [vmem:[%s4] sm:$0x1]
    %v202 = vlaneseq
    %v203 = vshrl.u32 %v202, 7
    %v204 = vsub.s32 0, %v203
    %v205 = vrot.slane %v200, %v204
    %207 = vmatprep.subr.mxu0 0.0
    %208 = vmatpush1.msra.mxu0 %v184
    %209 = vmatprep.subr.mxu0 0.0
    %210 = vmatpush1.msra.mxu0 %v185
    %211 = vmatprep.subr.mxu0 0.0
    %212 = vmatpush1.msra.mxu0 %v186
    %213 = vmatprep.subr.mxu0 0.0
    %214 = vmatpush1.msra.mxu0 %v187
    %215 = vmatprep.subr.mxu0 0.0
    %216 = vmatpush1.msra.mxu0 %v188
    %217 = vmatprep.subr.mxu0 0.0
    %218 = vmatpush1.msra.mxu0 %v189
    %219 = vmatprep.subr.mxu0 0.0
    %220 = vmatpush1.msra.mxu0 %v190
    %221 = vmatprep.subr.mxu0 0.0
    %222 = vmatpush1.msra.mxu0 %v191
    %223 = vmatprep.subr.mxu0 0.0
    %224 = vmatpush1.msra.mxu0 %v192
    %225 = vmatprep.subr.mxu0 0.0
    %226 = vmatpush1.msra.mxu0 %v193
    %227 = vmatprep.subr.mxu0 0.0
    %228 = vmatpush1.msra.mxu0 %v194
    %229 = vmatprep.subr.mxu0 0.0
    %230 = vmatpush1.msra.mxu0 %v195
    %231 = vmatprep.subr.mxu0 0.0
    %232 = vmatpush1.msra.mxu0 %v196
    %233 = vmatprep.subr.mxu0 0.0
    %234 = vmatpush1.msra.mxu0 %v197
    %235 = vmatprep.subr.mxu0 0.0
    %236 = vmatpush1.msra.mxu0 %v198
    %237 = vmatprep.subr.mxu0 0.0
    %238 = vmatpush1.msra.mxu0 %v199
    %239 = vmatprep.subr.mxu0 0.0
    %240 = vmatpush1.msra.mxu0 0.0
    %241 = vmatprep.subr.mxu0 0.0
    %242 = vmatpush1.msra.mxu0 0.0
    %243 = vmatprep.subr.mxu0 0.0
    %244 = vmatpush1.msra.mxu0 0.0
    %245 = vmatprep.subr.mxu0 0.0
    %246 = vmatpush1.msra.mxu0 0.0
    %247 = vmatprep.subr.mxu0 0.0
    %248 = vmatpush1.msra.mxu0 0.0
    %249 = vmatprep.subr.mxu0 0.0
    %250 = vmatpush1.msra.mxu0 0.0
    %251 = vmatprep.subr.mxu0 0.0
    %252 = vmatpush1.msra.mxu0 0.0
    %253 = vmatprep.subr.mxu0 0.0
    %254 = vmatpush1.msra.mxu0 0.0
    %255 = vmatprep.subr.mxu0 0.0
    %256 = vmatpush1.msra.mxu0 0.0
    %257 = vmatprep.subr.mxu0 0.0
    %258 = vmatpush1.msra.mxu0 0.0
    %259 = vmatprep.subr.mxu0 0.0
    %260 = vmatpush1.msra.mxu0 0.0
    %261 = vmatprep.subr.mxu0 0.0
    %262 = vmatpush1.msra.mxu0 0.0
    %263 = vmatprep.subr.mxu0 0.0
    %264 = vmatpush1.msra.mxu0 0.0
    %265 = vmatprep.subr.mxu0 0.0
    %266 = vmatpush1.msra.mxu0 0.0
    %267 = vmatprep.subr.mxu0 0.0
    %268 = vmatpush1.msra.mxu0 0.0
    %269 = vmatprep.subr.mxu0 0.0
    %270 = vmatpush1.msra.mxu0 0.0
    %271 = vmatprep.mubr.f32.mxu0 0.0
    %272 = vmatmul.mubr.f32.gmra.mrb[0].mxu0 %v182
    %v273 = vpop.f32.mrb[0].mxu0
    %v274 = vadd.f32 %v205, %v273
    %v275 = vpop.f32.mrb[0].mxu0
    %276 = vmatprep.mubr.f32.mxu0 0.0
    %277 = vmatmul.mubr.f32.gmra.mrb[0].mxu0 %v183
    %v278 = vpop.f32.mrb[0].mxu0
    %v279 = vadd.f32 %v205, %v278
    %v280 = vpop.f32.mrb[0].mxu0
    %281 = vdwg.mxu0
    %v282 = vmax.f32 %v274, 0.0
    %v283 = vmax.f32 %v279, 0.0
    %v284 = vld [vmem:[#allocation8] sm:$0xff]
    %v285 = vld [vmem:[#allocation8 + $0x8] sm:$0xff]
    %v286 = vld [vmem:[#allocation8 + $0x10] sm:$0xff]
    %v287 = vld [vmem:[#allocation8 + $0x18] sm:$0xff]
    %v288 = vld [vmem:[#allocation8 + $0x20] sm:$0xff]
    %v289 = vld [vmem:[#allocation8 + $0x28] sm:$0xff]
    %v290 = vld [vmem:[#allocation8 + $0x30] sm:$0xff]
    %v291 = vld [vmem:[#allocation8 + $0x38] sm:$0xff]
    %v292 = vld [vmem:[#allocation8 + $0x40] sm:$0xff]
    %v293 = vld [vmem:[#allocation8 + $0x48] sm:$0xff]
    %v294 = vld [vmem:[#allocation8 + $0x50] sm:$0xff]
    %v295 = vld [vmem:[#allocation8 + $0x58] sm:$0xff]
    %v296 = vld [vmem:[#allocation8 + $0x60] sm:$0xff]
    %v297 = vld [vmem:[#allocation8 + $0x68] sm:$0xff]
    %v298 = vld [vmem:[#allocation8 + $0x70] sm:$0xff]
    %v299 = vld [vmem:[#allocation8 + $0x78] sm:$0xff]
    %v300 = vld [vmem:[%s6] sm:$0x1]
    %v302 = vlaneseq
    %v303 = vshrl.u32 %v302, 7
    %v304 = vsub.s32 0, %v303
    %v305 = vrot.slane %v300, %v304
    %307 = vmatprep.subr.mxu0 0.0
    %308 = vmatpush1.msra.mxu0 %v284
    %309 = vmatprep.subr.mxu0 0.0
    %310 = vmatpush1.msra.mxu0 %v285
    %311 = vmatprep.subr.mxu0 0.0
    %312 = vmatpush1.msra.mxu0 %v286
    %313 = vmatprep.subr.mxu0 0.0
    %314 = vmatpush1.msra.mxu0 %v287
    %315 = vmatprep.subr.mxu0 0.0
    %316 = vmatpush1.msra.mxu0 %v288
    %317 = vmatprep.subr.mxu0 0.0
    %318 = vmatpush1.msra.mxu0 %v289
    %319 = vmatprep.subr.mxu0 0.0
    %320 = vmatpush1.msra.mxu0 %v290
    %321 = vmatprep.subr.mxu0 0.0
    %322 = vmatpush1.msra.mxu0 %v291
    %323 = vmatprep.subr.mxu0 0.0
    %324 = vmatpush1.msra.mxu0 %v292
    %325 = vmatprep.subr.mxu0 0.0
    %326 = vmatpush1.msra.mxu0 %v293
    %327 = vmatprep.subr.mxu0 0.0
    %328 = vmatpush1.msra.mxu0 %v294
    %329 = vmatprep.subr.mxu0 0.0
    %330 = vmatpush1.msra.mxu0 %v295
    %331 = vmatprep.subr.mxu0 0.0
    %332 = vmatpush1.msra.mxu0 %v296
    %333 = vmatprep.subr.mxu0 0.0
    %334 = vmatpush1.msra.mxu0 %v297
    %335 = vmatprep.subr.mxu0 0.0
    %336 = vmatpush1.msra.mxu0 %v298
    %337 = vmatprep.subr.mxu0 0.0
    %338 = vmatpush1.msra.mxu0 %v299
    %339 = vmatprep.subr.mxu0 0.0
    %340 = vmatpush1.msra.mxu0 0.0
    %341 = vmatprep.subr.mxu0 0.0
    %342 = vmatpush1.msra.mxu0 0.0
    %343 = vmatprep.subr.mxu0 0.0
    %344 = vmatpush1.msra.mxu0 0.0
    %345 = vmatprep.subr.mxu0 0.0
    %346 = vmatpush1.msra.mxu0 0.0
    %347 = vmatprep.subr.mxu0 0.0
    %348 = vmatpush1.msra.mxu0 0.0
    %349 = vmatprep.subr.mxu0 0.0
    %350 = vmatpush1.msra.mxu0 0.0
    %351 = vmatprep.subr.mxu0 0.0
    %352 = vmatpush1.msra.mxu0 0.0
    %353 = vmatprep.subr.mxu0 0.0
    %354 = vmatpush1.msra.mxu0 0.0
    %355 = vmatprep.subr.mxu0 0.0
    %356 = vmatpush1.msra.mxu0 0.0
    %357 = vmatprep.subr.mxu0 0.0
    %358 = vmatpush1.msra.mxu0 0.0
    %359 = vmatprep.subr.mxu0 0.0
    %360 = vmatpush1.msra.mxu0 0.0
    %361 = vmatprep.subr.mxu0 0.0
    %362 = vmatpush1.msra.mxu0 0.0
    %363 = vmatprep.subr.mxu0 0.0
    %364 = vmatpush1.msra.mxu0 0.0
    %365 = vmatprep.subr.mxu0 0.0
    %366 = vmatpush1.msra.mxu0 0.0
    %367 = vmatprep.subr.mxu0 0.0
    %368 = vmatpush1.msra.mxu0 0.0
    %369 = vmatprep.subr.mxu0 0.0
    %370 = vmatpush1.msra.mxu0 0.0
    %371 = vmatprep.mubr.f32.mxu0 0.0
    %372 = vmatmul.mubr.f32.gmra.mrb[0].mxu0 %v282
    %v373 = vpop.f32.mrb[0].mxu0
    %v374 = vadd.f32 %v305, %v373
    %v375 = vpop.f32.mrb[0].mxu0
    %376 = vmatprep.mubr.f32.mxu0 0.0
    %377 = vmatmul.mubr.f32.gmra.mrb[0].mxu0 %v283
    %v378 = vpop.f32.mrb[0].mxu0
    %v379 = vadd.f32 %v305, %v378
    %v380 = vpop.f32.mrb[0].mxu0
    %381 = vdwg.mxu0
    %382 = vst [vmem:[#allocation10] sm:$0xff] %v374
    %383 = vst [vmem:[#allocation10 + $0x8] sm:$0xff] %v379
    // Predicated region
    $region46: #{tpu_custom_call.1} parent=1 // pred_check
      _
    $region47: #{tpu_custom_call.1} parent=1 // pred_check_branch
      %385 = sbr.rel (0) target = $region49
    $region48: #{tpu_custom_call.1} parent=1 // pred_region
      %s387 = ssub.s32 256, 256
      %388 = vsyncadd [#allocation4], %s387
      %s389 = sshll.u32 [#allocation10], 4
      %s390 = int_to_ptr.vmem [resolvable:$true] %s389
      %395 = dma.vmem_to_hbm [thread:$0]  %s390, 256, %s7, [#allocation4], 128, 128, 8
    $region49: #{tpu_custom_call.1} parent=1 // pred_fallthru
      _
    // Predicated region
    $region50: #{tpu_custom_call.1} parent=1 // pred_check
      _
    $region51: #{tpu_custom_call.1} parent=1 // pred_check_branch
      %397 = sbr.rel (0) target = $region53
    $region52: #{tpu_custom_call.1} parent=1 // pred_region
      %398 = dma.done [#allocation4], 256
    $region53: #{tpu_custom_call.1} parent=1 // pred_fallthru
      _
    %399 = vsyncpa [#allocation3], 1
    %400 = vsyncpa [#allocation6], 1
    %401 = vsyncpa [#allocation9], 1
    %402 = vsyncpa [#allocation4], 1

// kernel: tpu_custom_call.1
$region0: #{tpu_custom_call.1}
  #allocation0 [shape = 'u32[]', space=smem, size = 0x4, offset = 0x4, fixed_abs, tag = 'smem constant byte address 0x4 - core index']
  #allocation1 [shape = 'u32[144,128]{1,0:T(1,128)}', space=vmem, size = 0x12000, scoped, tag = 'internal scratch']
  %s0 = inlined_call_operand.hbm [shape: f32[16,128], index: 0, kind: input, shape index: {}]
  %s1 = inlined_call_operand.hbm [shape: f32[128,128], index: 1, kind: input, shape index: {}]
  %s2 = inlined_call_operand.vmem [shape: f32[1,128], index: 2, kind: input, shape index: {}]
  %s3 = inlined_call_operand.hbm [shape: f32[1,128,128], index: 3, kind: input, shape index: {}]
  %s4 = inlined_call_operand.vmem [shape: f32[1,1,128], index: 4, kind: input, shape index: {}]
  %s5 = inlined_call_operand.hbm [shape: f32[128,128], index: 5, kind: input, shape index: {}]
  %s6 = inlined_call_operand.vmem [shape: f32[1,128], index: 6, kind: input, shape index: {}]
  %s7 = inlined_call_operand.hbm [shape: f32[16,128], index: 7, kind: output, shape index: {}]
  %s8 = sld [smem:[#allocation0]]
  $region54: #{tpu_custom_call.1} parent=0
    _
  %s10 = ssub.s32 1, %s8
  %s11 = scalar_select 0, %s10, %s8
  $region1: #{tpu_custom_call.1} parent=0
    #allocation2 [shape = 'u8[8192]{0}', space=vmem, size = 0x2000, scoped, tag = 'input window, operand 0, single buffered']
    #allocation3 [shape = 's32[1]{0}', space=sflag, size = 0x4, scoped, tag = 'scoped memory for tpu_custom_call.1']
    #allocation4 [shape = 's32[1]{0}', space=sflag, size = 0x4, scoped, tag = 'scoped memory for tpu_custom_call.1']
    #allocation5 [shape = 'u8[65536]{0}', space=vmem, size = 0x10000, scoped, tag = 'input window, operand 1, single buffered']
    #allocation6 [shape = 's32[1]{0}', space=sflag, size = 0x4, scoped, tag = 'scoped memory for tpu_custom_call.1']
    #allocation7 [shape = 'u8[65536]{0}', space=vmem, size = 0x10000, scoped, tag = 'input window, operand 3, single buffered']
    #allocation8 [shape = 'u8[65536]{0}', space=vmem, size = 0x10000, scoped, tag = 'input window, operand 5, single buffered']
    #allocation9 [shape = 's32[1]{0}', space=sflag, size = 0x4, scoped, tag = 'scoped memory for tpu_custom_call.1']
    #allocation10 [shape = 'u8[8192]{0}', space=vmem, size = 0x2000, scoped, tag = 'output window, operand 0, single buffered']
    %12 = vsyncpa [#allocation3], 0
    %13 = vsyncpa [#allocation6], 0
    %14 = vsyncpa [#allocation9], 0
    %15 = vsyncpa [#allocation4], 0
    // Predicated region
    $region2: #{tpu_custom_call.1} parent=1 // pred_check
      _
    $region3: #{tpu_custom_call.1} parent=1 // pred_check_branch
      %17 = sbr.rel (0) target = $region5
    $region4: #{tpu_custom_call.1} parent=1 // pred_region
      %s19 = ssub.s32 256, 256
      %20 = vsyncadd [#allocation3], %s19
      %s21 = sshll.u32 [#allocation2], 4
      %s22 = int_to_ptr.vmem [resolvable:$true] %s21
      %27 = dma.hbm_to_vmem [thread:$0]  %s0, 256, %s22, [#allocation3], 128, 128, 8
    $region5: #{tpu_custom_call.1} parent=1 // pred_fallthru
      _
    // Predicated region
    $region6: #{tpu_custom_call.1} parent=1 // pred_check
      _
    $region7: #{tpu_custom_call.1} parent=1 // pred_check_branch
      %29 = sbr.rel (0) target = $region9
    $region8: #{tpu_custom_call.1} parent=1 // pred_region
      %s31 = ssub.s32 2048, 2048
      %32 = vsyncadd [#allocation6], %s31
      %s33 = sshll.u32 [#allocation5], 4
      %s34 = int_to_ptr.vmem [resolvable:$true] %s33
      %39 = dma.hbm_to_vmem [thread:$0]  %s1, 2048, %s34, [#allocation6], 128, 128, 8
    $region9: #{tpu_custom_call.1} parent=1 // pred_fallthru
      _
    // Predicated region
    $region10: #{tpu_custom_call.1} parent=1 // pred_check
      _
    $region11: #{tpu_custom_call.1} parent=1 // pred_check_branch
      %41 = sbr.rel (0) target = $region13
    $region12: #{tpu_custom_call.1} parent=1 // pred_region
      _
    $region13: #{tpu_custom_call.1} parent=1 // pred_fallthru
      _
    // Predicated region
    $region14: #{tpu_custom_call.1} parent=1 // pred_check
      _
    $region15: #{tpu_custom_call.1} parent=1 // pred_check_branch
      %43 = sbr.rel (0) target = $region17
    $region16: #{tpu_custom_call.1} parent=1 // pred_region
      %s45 = ssub.s32 2048, 2048
      %46 = vsyncadd [#allocation6], %s45
      %s47 = sshll.u32 [#allocation7], 4
      %s48 = int_to_ptr.vmem [resolvable:$true] %s47
      %53 = dma.hbm_to_vmem [thread:$0]  %s3, 2048, %s48, [#allocation6], 128, 128, 8
    $region17: #{tpu_custom_call.1} parent=1 // pred_fallthru
      _
    // Predicated region
    $region18: #{tpu_custom_call.1} parent=1 // pred_check
      _
    $region19: #{tpu_custom_call.1} parent=1 // pred_check_branch
      %55 = sbr.rel (0) target = $region21
    $region20: #{tpu_custom_call.1} parent=1 // pred_region
      _
    $region21: #{tpu_custom_call.1} parent=1 // pred_fallthru
      _
    // Predicated region
    $region22: #{tpu_custom_call.1} parent=1 // pred_check
      _
    $region23: #{tpu_custom_call.1} parent=1 // pred_check_branch
      %57 = sbr.rel (0) target = $region25
    $region24: #{tpu_custom_call.1} parent=1 // pred_region
      %s59 = ssub.s32 2048, 2048
      %60 = vsyncadd [#allocation9], %s59
      %s61 = sshll.u32 [#allocation8], 4
      %s62 = int_to_ptr.vmem [resolvable:$true] %s61
      %67 = dma.hbm_to_vmem [thread:$0]  %s5, 2048, %s62, [#allocation9], 128, 128, 8
    $region25: #{tpu_custom_call.1} parent=1 // pred_fallthru
      _
    // Predicated region
    $region26: #{tpu_custom_call.1} parent=1 // pred_check
      _
    $region27: #{tpu_custom_call.1} parent=1 // pred_check_branch
      %69 = sbr.rel (0) target = $region29
    $region28: #{tpu_custom_call.1} parent=1 // pred_region
      _
    $region29: #{tpu_custom_call.1} parent=1 // pred_fallthru
      _
    // Predicated region
    $region30: #{tpu_custom_call.1} parent=1 // pred_check
      _
    $region31: #{tpu_custom_call.1} parent=1 // pred_check_branch
      %71 = sbr.rel (0) target = $region33
    $region32: #{tpu_custom_call.1} parent=1 // pred_region
      %72 = dma.done [#allocation3], 256
    $region33: #{tpu_custom_call.1} parent=1 // pred_fallthru
      _
    // Predicated region
    $region34: #{tpu_custom_call.1} parent=1 // pred_check
      _
    $region35: #{tpu_custom_call.1} parent=1 // pred_check_branch
      %74 = sbr.rel (0) target = $region37
    $region36: #{tpu_custom_call.1} parent=1 // pred_region
      %75 = dma.done [#allocation6], 2048
    $region37: #{tpu_custom_call.1} parent=1 // pred_fallthru
      _
    // Predicated region
    $region38: #{tpu_custom_call.1} parent=1 // pred_check
      _
    $region39: #{tpu_custom_call.1} parent=1 // pred_check_branch
      %77 = sbr.rel (0) target = $region41
    $region40: #{tpu_custom_call.1} parent=1 // pred_region
      %78 = dma.done [#allocation6], 2048
    $region41: #{tpu_custom_call.1} parent=1 // pred_fallthru
      _
    // Predicated region
    $region42: #{tpu_custom_call.1} parent=1 // pred_check
      _
    $region43: #{tpu_custom_call.1} parent=1 // pred_check_branch
      %80 = sbr.rel (0) target = $region45
    $region44: #{tpu_custom_call.1} parent=1 // pred_region
      %81 = dma.done [#allocation9], 2048
    $region45: #{tpu_custom_call.1} parent=1 // pred_fallthru
      _
    %v82 = vld [vmem:[#allocation2] sm:$0xff]
    %v83 = vld [vmem:[#allocation2 + $0x8] sm:$0xff]
    %v84 = vld [vmem:[#allocation5] sm:$0xff]
    %v85 = vld [vmem:[#allocation5 + $0x8] sm:$0xff]
    %v86 = vld [vmem:[#allocation5 + $0x10] sm:$0xff]
    %v87 = vld [vmem:[#allocation5 + $0x18] sm:$0xff]
    %v88 = vld [vmem:[#allocation5 + $0x20] sm:$0xff]
    %v89 = vld [vmem:[#allocation5 + $0x28] sm:$0xff]
    %v90 = vld [vmem:[#allocation5 + $0x30] sm:$0xff]
    %v91 = vld [vmem:[#allocation5 + $0x38] sm:$0xff]
    %v92 = vld [vmem:[#allocation5 + $0x40] sm:$0xff]
    %v93 = vld [vmem:[#allocation5 + $0x48] sm:$0xff]
    %v94 = vld [vmem:[#allocation5 + $0x50] sm:$0xff]
    %v95 = vld [vmem:[#allocation5 + $0x58] sm:$0xff]
    %v96 = vld [vmem:[#allocation5 + $0x60] sm:$0xff]
    %v97 = vld [vmem:[#allocation5 + $0x68] sm:$0xff]
    %v98 = vld [vmem:[#allocation5 + $0x70] sm:$0xff]
    %v99 = vld [vmem:[#allocation5 + $0x78] sm:$0xff]
    %v100 = vld [vmem:[%s2] sm:$0x1]
    %v102 = vlaneseq
    %v103 = vshrl.u32 %v102, 7
    %v104 = vsub.s32 0, %v103
    %v105 = vrot.slane %v100, %v104
    %107 = vmatprep.subr.mxu0 0.0
    %108 = vmatpush1.msra.mxu0 %v84
    %109 = vmatprep.subr.mxu0 0.0
    %110 = vmatpush1.msra.mxu0 %v85
    %111 = vmatprep.subr.mxu0 0.0
    %112 = vmatpush1.msra.mxu0 %v86
    %113 = vmatprep.subr.mxu0 0.0
    %114 = vmatpush1.msra.mxu0 %v87
    %115 = vmatprep.subr.mxu0 0.0
    %116 = vmatpush1.msra.mxu0 %v88
    %117 = vmatprep.subr.mxu0 0.0
    %118 = vmatpush1.msra.mxu0 %v89
    %119 = vmatprep.subr.mxu0 0.0
    %120 = vmatpush1.msra.mxu0 %v90
    %121 = vmatprep.subr.mxu0 0.0
    %122 = vmatpush1.msra.mxu0 %v91
    %123 = vmatprep.subr.mxu0 0.0
    %124 = vmatpush1.msra.mxu0 %v92
    %125 = vmatprep.subr.mxu0 0.0
    %126 = vmatpush1.msra.mxu0 %v93
    %127 = vmatprep.subr.mxu0 0.0
    %128 = vmatpush1.msra.mxu0 %v94
    %129 = vmatprep.subr.mxu0 0.0
    %130 = vmatpush1.msra.mxu0 %v95
    %131 = vmatprep.subr.mxu0 0.0
    %132 = vmatpush1.msra.mxu0 %v96
    %133 = vmatprep.subr.mxu0 0.0
    %134 = vmatpush1.msra.mxu0 %v97
    %135 = vmatprep.subr.mxu0 0.0
    %136 = vmatpush1.msra.mxu0 %v98
    %137 = vmatprep.subr.mxu0 0.0
    %138 = vmatpush1.msra.mxu0 %v99
    %139 = vmatprep.subr.mxu0 0.0
    %140 = vmatpush1.msra.mxu0 0.0
    %141 = vmatprep.subr.mxu0 0.0
    %142 = vmatpush1.msra.mxu0 0.0
    %143 = vmatprep.subr.mxu0 0.0
    %144 = vmatpush1.msra.mxu0 0.0
    %145 = vmatprep.subr.mxu0 0.0
    %146 = vmatpush1.msra.mxu0 0.0
    %147 = vmatprep.subr.mxu0 0.0
    %148 = vmatpush1.msra.mxu0 0.0
    %149 = vmatprep.subr.mxu0 0.0
    %150 = vmatpush1.msra.mxu0 0.0
    %151 = vmatprep.subr.mxu0 0.0
    %152 = vmatpush1.msra.mxu0 0.0
    %153 = vmatprep.subr.mxu0 0.0
    %154 = vmatpush1.msra.mxu0 0.0
    %155 = vmatprep.subr.mxu0 0.0
    %156 = vmatpush1.msra.mxu0 0.0
    %157 = vmatprep.subr.mxu0 0.0
    %158 = vmatpush1.msra.mxu0 0.0
    %159 = vmatprep.subr.mxu0 0.0
    %160 = vmatpush1.msra.mxu0 0.0
    %161 = vmatprep.subr.mxu0 0.0
    %162 = vmatpush1.msra.mxu0 0.0
    %163 = vmatprep.subr.mxu0 0.0
    %164 = vmatpush1.msra.mxu0 0.0
    %165 = vmatprep.subr.mxu0 0.0
    %166 = vmatpush1.msra.mxu0 0.0
    %167 = vmatprep.subr.mxu0 0.0
    %168 = vmatpush1.msra.mxu0 0.0
    %169 = vmatprep.subr.mxu0 0.0
    %170 = vmatpush1.msra.mxu0 0.0
    %171 = vmatprep.mubr.f32.mxu0 0.0
    %172 = vmatmul.mubr.f32.gmra.mrb[0].mxu0 %v82
    %v173 = vpop.f32.mrb[0].mxu0
    %v174 = vadd.f32 %v105, %v173
    %v175 = vpop.f32.mrb[0].mxu0
    %176 = vmatprep.mubr.f32.mxu0 0.0
    %177 = vmatmul.mubr.f32.gmra.mrb[0].mxu0 %v83
    %v178 = vpop.f32.mrb[0].mxu0
    %v179 = vadd.f32 %v105, %v178
    %v180 = vpop.f32.mrb[0].mxu0
    %181 = vdwg.mxu0
    %v182 = vmax.f32 %v174, 0.0
    %v183 = vmax.f32 %v179, 0.0
    %v184 = vld [vmem:[#allocation7] sm:$0xff]
    %v185 = vld [vmem:[#allocation7 + $0x8] sm:$0xff]
    %v186 = vld [vmem:[#allocation7 + $0x10] sm:$0xff]
    %v187 = vld [vmem:[#allocation7 + $0x18] sm:$0xff]
    %v188 = vld [vmem:[#allocation7 + $0x20] sm:$0xff]
    %v189 = vld [vmem:[#allocation7 + $0x28] sm:$0xff]
    %v190 = vld [vmem:[#allocation7 + $0x30] sm:$0xff]
    %v191 = vld [vmem:[#allocation7 + $0x38] sm:$0xff]
    %v192 = vld [vmem:[#allocation7 + $0x40] sm:$0xff]
    %v193 = vld [vmem:[#allocation7 + $0x48] sm:$0xff]
    %v194 = vld [vmem:[#allocation7 + $0x50] sm:$0xff]
    %v195 = vld [vmem:[#allocation7 + $0x58] sm:$0xff]
    %v196 = vld [vmem:[#allocation7 + $0x60] sm:$0xff]
    %v197 = vld [vmem:[#allocation7 + $0x68] sm:$0xff]
    %v198 = vld [vmem:[#allocation7 + $0x70] sm:$0xff]
    %v199 = vld [vmem:[#allocation7 + $0x78] sm:$0xff]
    %v200 = vld [vmem:[%s4] sm:$0x1]
    %v202 = vlaneseq
    %v203 = vshrl.u32 %v202, 7
    %v204 = vsub.s32 0, %v203
    %v205 = vrot.slane %v200, %v204
    %207 = vmatprep.subr.mxu0 0.0
    %208 = vmatpush1.msra.mxu0 %v184
    %209 = vmatprep.subr.mxu0 0.0
    %210 = vmatpush1.msra.mxu0 %v185
    %211 = vmatprep.subr.mxu0 0.0
    %212 = vmatpush1.msra.mxu0 %v186
    %213 = vmatprep.subr.mxu0 0.0
    %214 = vmatpush1.msra.mxu0 %v187
    %215 = vmatprep.subr.mxu0 0.0
    %216 = vmatpush1.msra.mxu0 %v188
    %217 = vmatprep.subr.mxu0 0.0
    %218 = vmatpush1.msra.mxu0 %v189
    %219 = vmatprep.subr.mxu0 0.0
    %220 = vmatpush1.msra.mxu0 %v190
    %221 = vmatprep.subr.mxu0 0.0
    %222 = vmatpush1.msra.mxu0 %v191
    %223 = vmatprep.subr.mxu0 0.0
    %224 = vmatpush1.msra.mxu0 %v192
    %225 = vmatprep.subr.mxu0 0.0
    %226 = vmatpush1.msra.mxu0 %v193
    %227 = vmatprep.subr.mxu0 0.0
    %228 = vmatpush1.msra.mxu0 %v194
    %229 = vmatprep.subr.mxu0 0.0
    %230 = vmatpush1.msra.mxu0 %v195
    %231 = vmatprep.subr.mxu0 0.0
    %232 = vmatpush1.msra.mxu0 %v196
    %233 = vmatprep.subr.mxu0 0.0
    %234 = vmatpush1.msra.mxu0 %v197
    %235 = vmatprep.subr.mxu0 0.0
    %236 = vmatpush1.msra.mxu0 %v198
    %237 = vmatprep.subr.mxu0 0.0
    %238 = vmatpush1.msra.mxu0 %v199
    %239 = vmatprep.subr.mxu0 0.0
    %240 = vmatpush1.msra.mxu0 0.0
    %241 = vmatprep.subr.mxu0 0.0
    %242 = vmatpush1.msra.mxu0 0.0
    %243 = vmatprep.subr.mxu0 0.0
    %244 = vmatpush1.msra.mxu0 0.0
    %245 = vmatprep.subr.mxu0 0.0
    %246 = vmatpush1.msra.mxu0 0.0
    %247 = vmatprep.subr.mxu0 0.0
    %248 = vmatpush1.msra.mxu0 0.0
    %249 = vmatprep.subr.mxu0 0.0
    %250 = vmatpush1.msra.mxu0 0.0
    %251 = vmatprep.subr.mxu0 0.0
    %252 = vmatpush1.msra.mxu0 0.0
    %253 = vmatprep.subr.mxu0 0.0
    %254 = vmatpush1.msra.mxu0 0.0
    %255 = vmatprep.subr.mxu0 0.0
    %256 = vmatpush1.msra.mxu0 0.0
    %257 = vmatprep.subr.mxu0 0.0
    %258 = vmatpush1.msra.mxu0 0.0
    %259 = vmatprep.subr.mxu0 0.0
    %260 = vmatpush1.msra.mxu0 0.0
    %261 = vmatprep.subr.mxu0 0.0
    %262 = vmatpush1.msra.mxu0 0.0
    %263 = vmatprep.subr.mxu0 0.0
    %264 = vmatpush1.msra.mxu0 0.0
    %265 = vmatprep.subr.mxu0 0.0
    %266 = vmatpush1.msra.mxu0 0.0
    %267 = vmatprep.subr.mxu0 0.0
    %268 = vmatpush1.msra.mxu0 0.0
    %269 = vmatprep.subr.mxu0 0.0
    %270 = vmatpush1.msra.mxu0 0.0
    %271 = vmatprep.mubr.f32.mxu0 0.0
    %272 = vmatmul.mubr.f32.gmra.mrb[0].mxu0 %v182
    %v273 = vpop.f32.mrb[0].mxu0
    %v274 = vadd.f32 %v205, %v273
    %v275 = vpop.f32.mrb[0].mxu0
    %276 = vmatprep.mubr.f32.mxu0 0.0
    %277 = vmatmul.mubr.f32.gmra.mrb[0].mxu0 %v183
    %v278 = vpop.f32.mrb[0].mxu0
    %v279 = vadd.f32 %v205, %v278
    %v280 = vpop.f32.mrb[0].mxu0
    %281 = vdwg.mxu0
    %v282 = vmax.f32 %v274, 0.0
    %v283 = vmax.f32 %v279, 0.0
    %v284 = vld [vmem:[#allocation8] sm:$0xff]
    %v285 = vld [vmem:[#allocation8 + $0x8] sm:$0xff]
    %v286 = vld [vmem:[#allocation8 + $0x10] sm:$0xff]
    %v287 = vld [vmem:[#allocation8 + $0x18] sm:$0xff]
    %v288 = vld [vmem:[#allocation8 + $0x20] sm:$0xff]
    %v289 = vld [vmem:[#allocation8 + $0x28] sm:$0xff]
    %v290 = vld [vmem:[#allocation8 + $0x30] sm:$0xff]
    %v291 = vld [vmem:[#allocation8 + $0x38] sm:$0xff]
    %v292 = vld [vmem:[#allocation8 + $0x40] sm:$0xff]
    %v293 = vld [vmem:[#allocation8 + $0x48] sm:$0xff]
    %v294 = vld [vmem:[#allocation8 + $0x50] sm:$0xff]
    %v295 = vld [vmem:[#allocation8 + $0x58] sm:$0xff]
    %v296 = vld [vmem:[#allocation8 + $0x60] sm:$0xff]
    %v297 = vld [vmem:[#allocation8 + $0x68] sm:$0xff]
    %v298 = vld [vmem:[#allocation8 + $0x70] sm:$0xff]
    %v299 = vld [vmem:[#allocation8 + $0x78] sm:$0xff]
    %v300 = vld [vmem:[%s6] sm:$0x1]
    %v302 = vlaneseq
    %v303 = vshrl.u32 %v302, 7
    %v304 = vsub.s32 0, %v303
    %v305 = vrot.slane %v300, %v304
    %307 = vmatprep.subr.mxu0 0.0
    %308 = vmatpush1.msra.mxu0 %v284
    %309 = vmatprep.subr.mxu0 0.0
    %310 = vmatpush1.msra.mxu0 %v285
    %311 = vmatprep.subr.mxu0 0.0
    %312 = vmatpush1.msra.mxu0 %v286
    %313 = vmatprep.subr.mxu0 0.0
    %314 = vmatpush1.msra.mxu0 %v287
    %315 = vmatprep.subr.mxu0 0.0
    %316 = vmatpush1.msra.mxu0 %v288
    %317 = vmatprep.subr.mxu0 0.0
    %318 = vmatpush1.msra.mxu0 %v289
    %319 = vmatprep.subr.mxu0 0.0
    %320 = vmatpush1.msra.mxu0 %v290
    %321 = vmatprep.subr.mxu0 0.0
    %322 = vmatpush1.msra.mxu0 %v291
    %323 = vmatprep.subr.mxu0 0.0
    %324 = vmatpush1.msra.mxu0 %v292
    %325 = vmatprep.subr.mxu0 0.0
    %326 = vmatpush1.msra.mxu0 %v293
    %327 = vmatprep.subr.mxu0 0.0
    %328 = vmatpush1.msra.mxu0 %v294
    %329 = vmatprep.subr.mxu0 0.0
    %330 = vmatpush1.msra.mxu0 %v295
    %331 = vmatprep.subr.mxu0 0.0
    %332 = vmatpush1.msra.mxu0 %v296
    %333 = vmatprep.subr.mxu0 0.0
    %334 = vmatpush1.msra.mxu0 %v297
    %335 = vmatprep.subr.mxu0 0.0
    %336 = vmatpush1.msra.mxu0 %v298
    %337 = vmatprep.subr.mxu0 0.0
    %338 = vmatpush1.msra.mxu0 %v299
    %339 = vmatprep.subr.mxu0 0.0
    %340 = vmatpush1.msra.mxu0 0.0
    %341 = vmatprep.subr.mxu0 0.0
    %342 = vmatpush1.msra.mxu0 0.0
    %343 = vmatprep.subr.mxu0 0.0
    %344 = vmatpush1.msra.mxu0 0.0
    %345 = vmatprep.subr.mxu0 0.0
    %346 = vmatpush1.msra.mxu0 0.0
    %347 = vmatprep.subr.mxu0 0.0
    %348 = vmatpush1.msra.mxu0 0.0
    %349 = vmatprep.subr.mxu0 0.0
    %350 = vmatpush1.msra.mxu0 0.0
    %351 = vmatprep.subr.mxu0 0.0
    %352 = vmatpush1.msra.mxu0 0.0
    %353 = vmatprep.subr.mxu0 0.0
    %354 = vmatpush1.msra.mxu0 0.0
    %355 = vmatprep.subr.mxu0 0.0
    %356 = vmatpush1.msra.mxu0 0.0
    %357 = vmatprep.subr.mxu0 0.0
    %358 = vmatpush1.msra.mxu0 0.0
    %359 = vmatprep.subr.mxu0 0.0
    %360 = vmatpush1.msra.mxu0 0.0
    %361 = vmatprep.subr.mxu0 0.0
    %362 = vmatpush1.msra.mxu0 0.0
    %363 = vmatprep.subr.mxu0 0.0
    %364 = vmatpush1.msra.mxu0 0.0
    %365 = vmatprep.subr.mxu0 0.0
    %366 = vmatpush1.msra.mxu0 0.0
    %367 = vmatprep.subr.mxu0 0.0
    %368 = vmatpush1.msra.mxu0 0.0
    %369 = vmatprep.subr.mxu0 0.0
    %370 = vmatpush1.msra.mxu0 0.0
    %371 = vmatprep.mubr.f32.mxu0 0.0
    %372 = vmatmul.mubr.f32.gmra.mrb[0].mxu0 %v282
    %v373 = vpop.f32.mrb[0].mxu0
    %v374 = vadd.f32 %v305, %v373
    %v375 = vpop.f32.mrb[0].mxu0
    %376 = vmatprep.mubr.f32.mxu0 0.0
    %377 = vmatmul.mubr.f32.gmra.mrb[0].mxu0 %v283
    %v378 = vpop.f32.mrb[0].mxu0
    %v379 = vadd.f32 %v305, %v378
    %v380 = vpop.f32.mrb[0].mxu0
    %381 = vdwg.mxu0
    %382 = vst [vmem:[#allocation10] sm:$0xff] %v374
    %383 = vst [vmem:[#allocation10 + $0x8] sm:$0xff] %v379
    // Predicated region
    $region46: #{tpu_custom_call.1} parent=1 // pred_check
      _
    $region47: #{tpu_custom_call.1} parent=1 // pred_check_branch
      %385 = sbr.rel (0) target = $region49
    $region48: #{tpu_custom_call.1} parent=1 // pred_region
      %s387 = ssub.s32 256, 256
      %388 = vsyncadd [#allocation4], %s387
      %s389 = sshll.u32 [#allocation10], 4
      %s390 = int_to_ptr.vmem [resolvable:$true] %s389
      %395 = dma.vmem_to_hbm [thread:$0]  %s390, 256, %s7, [#allocation4], 128, 128, 8
    $region49: #{tpu_custom_call.1} parent=1 // pred_fallthru
      _
    // Predicated region
    $region50: #{tpu_custom_call.1} parent=1 // pred_check
      _
    $region51: #{tpu_custom_call.1} parent=1 // pred_check_branch
      %397 = sbr.rel (0) target = $region53
    $region52: #{tpu_custom_call.1} parent=1 // pred_region
      %398 = dma.done [#allocation4], 256
    $region53: #{tpu_custom_call.1} parent=1 // pred_fallthru
      _
    %399 = vsyncpa [#allocation3], 1
    %400 = vsyncpa [#allocation6], 1
    %401 = vsyncpa [#allocation9], 1
    %402 = vsyncpa [#allocation4], 1

</llo_original>
